<compile_context>
chip_gen: v7x
topology: tpu7x:2x2x1
jax: 0.10.0
libtpu: 0.0.40
codegen_flags: <defaults>
</compile_context>

<pallas_src>
import functools

import jax
import jax.numpy as jnp
from jax import lax
from jax.experimental import pallas as pl
from jax.experimental.pallas import tpu as pltpu

_LANES = 128


def _round_up(x, m):
    return (x + m - 1) // m * m


def _sublane_multiple(dtype):
    # packed-sublane tiling: 8 for 4-byte, 16 for 2-byte, 32 for 1-byte dtypes
    return max(8, 32 // max(jnp.dtype(dtype).itemsize, 1))


def _vmem_budget():
    """Returns (scoped VMEM limit to request, byte budget for pipelined tiles)."""
    phys = 128 * 1024 * 1024
    try:
        phys = int(pltpu.get_tpu_info().vmem_capacity_bytes)
    except Exception:
        pass
    limit = min(32 * 1024 * 1024, phys // 2)   # v7x: 64 MiB phys -> 32 MiB scoped
    return limit, int(limit * 0.7)


def _pick_block_rows(total_rows, bytes_per_row, sub, budget):
    rows = budget // max(bytes_per_row, 1)
    rows = min(rows, 8192)
    rows = max((rows // sub) * sub, sub)
    return int(min(rows, _round_up(total_rows, sub)))


def _focal_weight(one_minus_p, gamma):
    g = float(gamma)
    if g == 2.0:                          # module default: two VPU multiplies
        return one_minus_p * one_minus_p
    if g == int(g) and g >= 0.0:          # other integer gammas
        return lax.integer_pow(one_minus_p, int(g))
    return jnp.power(jnp.maximum(one_minus_p, 0.0), g)  # general float gamma


def _focal_general_kernel(x_ref, t_ref, *rest, gamma, n_total, has_alpha):
    """General C: (tile, C) logits, one-hot gather + stable log-sum-exp."""
    if has_alpha:
        a_ref, o_ref = rest
    else:
        a_ref = None
        (o_ref,) = rest

    i = pl.program_id(0)
    logits = x_ref[...].astype(jnp.float32)          # (tn, C)
    targets = t_ref[...]                             # (tn, 1) int32
    tn, c = logits.shape

    cls_ids = lax.broadcasted_iota(jnp.int32, (tn, c), 1)
    onehot = (cls_ids == targets).astype(jnp.float32)

    m = jnp.max(logits, axis=-1, keepdims=True)
    denom = jnp.sum(jnp.exp(logits - m), axis=-1, keepdims=True)
    logit_t = jnp.sum(logits * onehot, axis=-1, keepdims=True)
    log_p = (logit_t - m) - jnp.log(denom)            # (tn, 1), stable
    probs = jnp.exp(log_p)

    loss = -_focal_weight(1.0 - probs, gamma) * log_p
    if has_alpha:
        loss = loss * a_ref[...].astype(jnp.float32)

    # Mask the loss (not the logits) for the ragged last block.
    row_ids = i * tn + lax.broadcasted_iota(jnp.int32, (tn, 1), 0)
    loss = jnp.where(row_ids < n_total, loss, 0.0)

    part = jnp.sum(loss).astype(jnp.float32)
    o_ref[...] = jnp.full(o_ref.shape, part, jnp.float32)


def _focal_binary_kernel(x0_ref, x1_ref, t_ref, *rest, gamma, n_total, has_alpha):
    """C == 2 lane-dense path on (rows, 128) slabs; one sample per lane."""
    if has_alpha:
        a_ref, o_ref = rest
    else:
        a_ref = None
        (o_ref,) = rest

    i = pl.program_id(0)
    x0 = x0_ref[...].astype(jnp.float32)              # (tr, 128)
    x1 = x1_ref[...].astype(jnp.float32)
    t = t_ref[...]                                    # (tr, 128) int32
    tr, lanes = x0.shape

    sign = jnp.where(t == 1, 1.0, -1.0).astype(jnp.float32)
    d = sign * (x1 - x0)                              # logit_target - logit_other
    # log p = log sigmoid(d) = -softplus(-d), numerically stable form.
    log_p = -(jnp.maximum(-d, 0.0) + jnp.log(1.0 + jnp.exp(-jnp.abs(d))))
    probs = jnp.exp(log_p)

    loss = -_focal_weight(1.0 - probs, gamma) * log_p
    if has_alpha:
        loss = loss * a_ref[...].astype(jnp.float32)

    row_ids = i * tr + lax.broadcasted_iota(jnp.int32, (tr, lanes), 0)
    lane_ids = lax.broadcasted_iota(jnp.int32, (tr, lanes), 1)
    sample_ids = row_ids * lanes + lane_ids
    loss = jnp.where(sample_ids < n_total, loss, 0.0)

    part = jnp.sum(loss).astype(jnp.float32)
    o_ref[...] = jnp.full(o_ref.shape, part, jnp.float32)


def focal_loss(inputs, targets, alpha=None, gamma=2.0, size_average=True,
               block_rows=None):
    """Focal loss over (N, C) logits and (N,) integer class targets."""
    inputs = jnp.asarray(inputs)
    n, c = inputs.shape
    targets = jnp.asarray(targets, jnp.int32).reshape(n)

    has_alpha = alpha is not None
    if has_alpha:
        alpha_vec = jnp.asarray(alpha, jnp.float32).reshape(-1)
        assert alpha_vec.shape[0] == c, "alpha must have one entry per class"
        alpha_t = alpha_vec[targets]              # per-row factor, gathered once
    else:
        alpha_t = None

    sub = _sublane_multiple(inputs.dtype)
    itemsize = jnp.dtype(inputs.dtype).itemsize
    vmem_limit, budget = _vmem_budget()

    if c == 2:
        # Lane-dense binary path (module default class_num=2).
        rows = int(pl.cdiv(n, _LANES))

        def slab(v):
            v = jnp.pad(v, (0, rows * _LANES - n))
            return v.reshape(rows, _LANES)

        args = [slab(inputs[:, 0]), slab(inputs[:, 1]), slab(targets)]
        bytes_per_row = 2 * (2 * _LANES * itemsize + _LANES * 4)
        if has_alpha:
            args.append(slab(alpha_t))
            bytes_per_row += 2 * _LANES * 4

        tr = block_rows if block_rows is not None else _pick_block_rows(
            rows, bytes_per_row, sub, budget)
        tr = min(max((int(tr) // sub) * sub, sub), _round_up(rows, sub))
        grid = (int(pl.cdiv(rows, tr)),)
        in_specs = [pl.BlockSpec((tr, _LANES), lambda i: (i, 0))
                    for _ in range(len(args))]
        kernel = functools.partial(_focal_binary_kernel, gamma=float(gamma),
                                   n_total=int(n), has_alpha=has_alpha)
    else:
        # General path: (tile, C) logit blocks.
        c_pad = _round_up(c, _LANES)
        args = [inputs, targets.reshape(n, 1)]
        bytes_per_row = 2 * (c_pad * itemsize + _LANES * 4)
        if has_alpha:
            args.append(alpha_t.reshape(n, 1))
            bytes_per_row += 2 * _LANES * 4

        tn = block_rows if block_rows is not None else _pick_block_rows(
            n, bytes_per_row, sub, budget)
        tn = min(max((int(tn) // sub) * sub, sub), _round_up(n, sub))
        grid = (int(pl.cdiv(n, tn)),)
        in_specs = [pl.BlockSpec((tn, c), lambda i: (i, 0)),
                    pl.BlockSpec((tn, 1), lambda i: (i, 0))]
        if has_alpha:
            in_specs.append(pl.BlockSpec((tn, 1), lambda i: (i, 0)))
        kernel = functools.partial(_focal_general_kernel, gamma=float(gamma),
                                   n_total=int(n), has_alpha=has_alpha)

    # One independent (8, 128) partial-sum block per grid step -> the whole grid
    # axis is "parallel" (both v7x TensorCores) and there is no carried scratch.
    partials = pl.pallas_call(
        kernel,
        out_shape=jax.ShapeDtypeStruct((grid[0], 8, _LANES), jnp.float32),
        grid_spec=pltpu.PrefetchScalarGridSpec(
            num_scalar_prefetch=0,
            grid=grid,
            in_specs=in_specs,
            out_specs=pl.BlockSpec((1, 8, _LANES), lambda i: (i, 0, 0)),
        ),
        compiler_params=pltpu.CompilerParams(
            dimension_semantics=("parallel",),
            vmem_limit_bytes=vmem_limit,
        ),
    )(*args)

    total = jnp.sum(partials[:, 0, 0])
    if size_average:
        total = total / jnp.float32(n)
    return total


def _focal_loss_ref(inputs, targets, alpha, gamma, size_average):
    x = jnp.asarray(inputs, jnp.float32)
    p = jax.nn.softmax(x, axis=-1)
    probs = jnp.take_along_axis(p, targets[:, None].astype(jnp.int32), axis=1)
    if alpha is None:
        a = jnp.ones_like(probs)
    else:
        a = jnp.asarray(alpha, jnp.float32).reshape(-1)[targets][:, None]
    batch_loss = -a * jnp.power(1.0 - probs, gamma) * jnp.log(probs)
    return jnp.mean(batch_loss) if size_average else jnp.sum(batch_loss)


if __name__ == "__main__":
    key = jax.random.PRNGKey(0)
    keys = jax.random.split(key, 10)

    # Case 1: module defaults (class_num=2, alpha=ones, gamma=2, mean) -> binary path.
    x1 = jax.random.normal(keys[0], (37, 2), jnp.float32)
    t1 = jax.random.randint(keys[1], (37,), 0, 2, jnp.int32)
    got1 = jax.block_until_ready(focal_loss(x1, t1))
    ref1 = _focal_loss_ref(x1, t1, None, 2.0, True)
    assert jnp.allclose(got1, ref1, rtol=1e-5, atol=1e-6), (got1, ref1)

    # Case 2: binary path, multi-block ragged grid, custom alpha, sum reduction.
    x2 = jax.random.normal(keys[2], (1500, 2), jnp.float32)
    t2 = jax.random.randint(keys[3], (1500,), 0, 2, jnp.int32)
    a2 = jnp.array([0.25, 0.75], jnp.float32)
    got2 = jax.block_until_ready(
        focal_loss(x2, t2, alpha=a2, size_average=False, block_rows=8))
    ref2 = _focal_loss_ref(x2, t2, a2, 2.0, False)
    assert jnp.allclose(got2, ref2, rtol=1e-5, atol=1e-3), (got2, ref2)

    # Case 3: general path (C=5), single ragged block, mean reduction.
    x3 = jax.random.normal(keys[4], (53, 5), jnp.float32)
    t3 = jax.random.randint(keys[5], (53,), 0, 5, jnp.int32)
    got3 = jax.block_until_ready(focal_loss(x3, t3))
    ref3 = _focal_loss_ref(x3, t3, None, 2.0, True)
    assert jnp.allclose(got3, ref3, rtol=1e-5, atol=1e-6), (got3, ref3)

    # Case 4: general path, multi-block ragged grid, float gamma, alpha, sum.
    x4 = jax.random.normal(keys[6], (200, 7), jnp.float32)
    t4 = jax.random.randint(keys[7], (200,), 0, 7, jnp.int32)
    a4 = jnp.linspace(0.2, 1.0, 7).astype(jnp.float32)
    got4 = jax.block_until_ready(
        focal_loss(x4, t4, alpha=a4, gamma=1.5, size_average=False, block_rows=16))
    ref4 = _focal_loss_ref(x4, t4, a4, 1.5, False)
    assert jnp.allclose(got4, ref4, rtol=1e-5, atol=1e-3), (got4, ref4)

    # Case 5: bf16 logits (16-row packed-sublane tiling), general path, mean.
    x5 = jax.random.normal(keys[8], (64, 5), jnp.float32).astype(jnp.bfloat16)
    t5 = jax.random.randint(keys[9], (64,), 0, 5, jnp.int32)
    got5 = jax.block_until_ready(focal_loss(x5, t5))
    ref5 = _focal_loss_ref(x5, t5, None, 2.0, True)
    assert jnp.allclose(got5, ref5, rtol=1e-4, atol=1e-5), (got5, ref5)

    print("KERNEL_OK")
</pallas_src>

<mosaic_0001>
module attributes {stable_mosaic.version = 11 : i64} {
  func.func @_focal_binary_kernel(%arg0: i32, %arg1: memref<8x128xf32, #tpu.memory_space<vmem>>, %arg2: memref<8x128xf32, #tpu.memory_space<vmem>>, %arg3: memref<8x128xi32, #tpu.memory_space<vmem>>, %arg4: memref<1x8x128xf32, #tpu.memory_space<vmem>>) attributes {dimension_semantics = [#tpu.dimension_semantics<parallel>], iteration_bounds = array<i64: 1>, scalar_prefetch = 0 : i64, scratch_operands = 0 : i64, tpu.core_type = #tpu.core_type<tc>, window_params = [{transform_indices = @transform_0, window_bounds = array<i64: 8, 128>}, {transform_indices = @transform_1, window_bounds = array<i64: 8, 128>}, {transform_indices = @transform_2, window_bounds = array<i64: 8, 128>}, {transform_indices = @transform_3, window_bounds = array<i64: 1, 8, 128>}]} {
    %c0 = arith.constant 0 : index
    %c0_0 = arith.constant 0 : index
    %0 = vector.load %arg1[%c0, %c0_0] : memref<8x128xf32, #tpu.memory_space<vmem>>, vector<8x128xf32>
    %c0_1 = arith.constant 0 : index
    %c0_2 = arith.constant 0 : index
    %1 = vector.load %arg2[%c0_1, %c0_2] : memref<8x128xf32, #tpu.memory_space<vmem>>, vector<8x128xf32>
    %c0_3 = arith.constant 0 : index
    %c0_4 = arith.constant 0 : index
    %2 = vector.load %arg3[%c0_3, %c0_4] : memref<8x128xi32, #tpu.memory_space<vmem>>, vector<8x128xi32>
    %c1_i32 = arith.constant 1 : i32
    %3 = vector.broadcast %c1_i32 : i32 to vector<8x128xi32>
    %4 = arith.cmpi eq, %2, %3 : vector<8x128xi32>
    %cst = arith.constant 1.000000e+00 : f32
    %cst_5 = arith.constant -1.000000e+00 : f32
    %5 = vector.broadcast %cst : f32 to vector<8x128xf32>
    %6 = vector.broadcast %cst_5 : f32 to vector<8x128xf32>
    %7 = arith.select %4, %5, %6 : vector<8x128xi1>, vector<8x128xf32>
    %8 = arith.subf %1, %0 : vector<8x128xf32>
    %9 = arith.mulf %7, %8 : vector<8x128xf32>
    %cst_6 = arith.constant 0.000000e+00 : f32
    %10 = vector.broadcast %cst_6 : f32 to vector<8x128xf32>
    %11 = arith.subf %10, %9 : vector<8x128xf32>
    %cst_7 = arith.constant 0.000000e+00 : f32
    %12 = vector.broadcast %cst_7 : f32 to vector<8x128xf32>
    %13 = arith.maximumf %11, %12 : vector<8x128xf32>
    %14 = math.absf %9 : vector<8x128xf32>
    %cst_8 = arith.constant 0.000000e+00 : f32
    %15 = vector.broadcast %cst_8 : f32 to vector<8x128xf32>
    %16 = arith.subf %15, %14 : vector<8x128xf32>
    %17 = math.exp %16 : vector<8x128xf32>
    %cst_9 = arith.constant 1.000000e+00 : f32
    %18 = vector.broadcast %cst_9 : f32 to vector<8x128xf32>
    %19 = arith.addf %18, %17 : vector<8x128xf32>
    %20 = math.log %19 : vector<8x128xf32>
    %21 = arith.addf %13, %20 : vector<8x128xf32>
    %cst_10 = arith.constant 0.000000e+00 : f32
    %22 = vector.broadcast %cst_10 : f32 to vector<8x128xf32>
    %23 = arith.subf %22, %21 : vector<8x128xf32>
    %24 = math.exp %23 : vector<8x128xf32>
    %cst_11 = arith.constant 1.000000e+00 : f32
    %25 = vector.broadcast %cst_11 : f32 to vector<8x128xf32>
    %26 = arith.subf %25, %24 : vector<8x128xf32>
    %27 = arith.mulf %26, %26 : vector<8x128xf32>
    %cst_12 = arith.constant 0.000000e+00 : f32
    %28 = vector.broadcast %cst_12 : f32 to vector<8x128xf32>
    %29 = arith.subf %28, %27 : vector<8x128xf32>
    %30 = arith.mulf %29, %23 : vector<8x128xf32>
    %c8_i32 = arith.constant 8 : i32
    %31 = arith.muli %arg0, %c8_i32 : i32
    %32 = tpu.iota {dimensions = array<i32: 0>} : vector<8x128xi32>
    %33 = vector.broadcast %31 : i32 to vector<8x128xi32>
    %34 = arith.addi %33, %32 : vector<8x128xi32>
    %35 = tpu.iota {dimensions = array<i32: 1>} : vector<8x128xi32>
    %c128_i32 = arith.constant 128 : i32
    %36 = vector.broadcast %c128_i32 : i32 to vector<8x128xi32>
    %37 = arith.muli %34, %36 : vector<8x128xi32>
    %38 = arith.addi %37, %35 : vector<8x128xi32>
    %c37_i32 = arith.constant 37 : i32
    %39 = vector.broadcast %c37_i32 : i32 to vector<8x128xi32>
    %40 = arith.cmpi slt, %38, %39 : vector<8x128xi32>
    %cst_13 = arith.constant 0.000000e+00 : f32
    %41 = vector.broadcast %cst_13 : f32 to vector<8x128xf32>
    %42 = arith.select %40, %30, %41 : vector<8x128xi1>, vector<8x128xf32>
    %43 = vector.shape_cast %42 : vector<8x128xf32> to vector<1x8x128xf32>
    %cst_14 = arith.constant dense<0.000000e+00> : vector<1xf32>
    %44 = vector.multi_reduction <add>, %43, %cst_14 [1, 2] : vector<1x8x128xf32> to vector<1xf32>
    %45 = vector.shape_cast %44 : vector<1xf32> to vector<1x1x1xf32>
    %46 = vector.extract %45[0, 0, 0] : f32 from vector<1x1x1xf32>
    %47 = vector.broadcast %46 : f32 to vector<1x8x128xf32>
    %c0_15 = arith.constant 0 : index
    %c0_16 = arith.constant 0 : index
    %c0_17 = arith.constant 0 : index
    %48 = vector.load %arg4[%c0_15, %c0_16, %c0_17] : memref<1x8x128xf32, #tpu.memory_space<vmem>>, vector<1x8x128xf32>
    tpu.vector_store %arg4[%c0_15, %c0_16, %c0_17], %47 {strides = array<i32>} : memref<1x8x128xf32, #tpu.memory_space<vmem>>, vector<1x8x128xf32>,
    return
  }
  func.func @transform_0(%arg0: i32) -> (i32, i32) {
    %c0_i32 = arith.constant 0 : i32
    %c0_i32_0 = arith.constant 0 : i32
    return %arg0, %c0_i32 : i32, i32
  }
  func.func @transform_1(%arg0: i32) -> (i32, i32) {
    %c0_i32 = arith.constant 0 : i32
    %c0_i32_0 = arith.constant 0 : i32
    return %arg0, %c0_i32 : i32, i32
  }
  func.func @transform_2(%arg0: i32) -> (i32, i32) {
    %c0_i32 = arith.constant 0 : i32
    %c0_i32_0 = arith.constant 0 : i32
    return %arg0, %c0_i32 : i32, i32
  }
  func.func @transform_3(%arg0: i32) -> (i32, i32, i32) {
    %c0_i32 = arith.constant 0 : i32
    %c0_i32_0 = arith.constant 0 : i32
    %c0_i32_1 = arith.constant 0 : i32
    return %arg0, %c0_i32, %c0_i32_0 : i32, i32, i32
  }
}

</mosaic_0001>

<llo_original>
// kernel: tpu_custom_call.1
$region0: #{tpu_custom_call.1}
  #allocation0 [shape = 'u32[]', space=smem, size = 0x4, offset = 0x4, fixed_abs, tag = 'smem constant byte address 0x4 - core index']
  #allocation1 [shape = 'u32[144,128]{1,0:T(1,128)}', space=vmem, size = 0x12000, scoped, tag = 'internal scratch']
  %s0 = inlined_call_operand.hbm [shape: f32[1,128], index: 0, kind: input, shape index: {}]
  %s1 = inlined_call_operand.vmem [shape: f32[1,128], index: 1, kind: input, shape index: {}]
  %s2 = inlined_call_operand.vmem [shape: s32[1,128], index: 2, kind: input, shape index: {}]
  %s3 = inlined_call_operand.hbm [shape: f32[1,8,128], index: 3, kind: output, shape index: {}]
  %s4 = sld [smem:[#allocation0]]
  $region26: #{tpu_custom_call.1} parent=0
    _
  %s6 = ssub.s32 1, %s4
  %s7 = scalar_select 0, %s6, %s4
  $region1: #{tpu_custom_call.1} parent=0
    #allocation2 [shape = 'u8[4096]{0}', space=vmem, size = 0x1000, scoped, tag = 'input window, operand 0, single buffered']
    #allocation3 [shape = 's32[1]{0}', space=sflag, size = 0x4, scoped, tag = 'scoped memory for tpu_custom_call.1']
    #allocation4 [shape = 's32[1]{0}', space=sflag, size = 0x4, scoped, tag = 'scoped memory for tpu_custom_call.1']
    #allocation5 [shape = 'u8[4096]{0}', space=vmem, size = 0x1000, scoped, tag = 'output window, operand 0, single buffered']
    %8 = vsyncpa [#allocation3], 0
    %9 = vsyncpa [#allocation4], 0
    // Predicated region
    $region2: #{tpu_custom_call.1} parent=1 // pred_check
      _
    $region3: #{tpu_custom_call.1} parent=1 // pred_check_branch
      %11 = sbr.rel (0) target = $region5
    $region4: #{tpu_custom_call.1} parent=1 // pred_region
      %s13 = ssub.s32 128, 16
      %14 = vsyncadd [#allocation3], %s13
      %s15 = sshll.u32 [#allocation2], 4
      %s16 = int_to_ptr.vmem [resolvable:$true] %s15
      %21 = dma.hbm_to_vmem [thread:$0]  %s0, 16, %s16, [#allocation3], 16, 16, 1
    $region5: #{tpu_custom_call.1} parent=1 // pred_fallthru
      _
    // Predicated region
    $region6: #{tpu_custom_call.1} parent=1 // pred_check
      _
    $region7: #{tpu_custom_call.1} parent=1 // pred_check_branch
      %23 = sbr.rel (0) target = $region9
    $region8: #{tpu_custom_call.1} parent=1 // pred_region
      _
    $region9: #{tpu_custom_call.1} parent=1 // pred_fallthru
      _
    // Predicated region
    $region10: #{tpu_custom_call.1} parent=1 // pred_check
      _
    $region11: #{tpu_custom_call.1} parent=1 // pred_check_branch
      %25 = sbr.rel (0) target = $region13
    $region12: #{tpu_custom_call.1} parent=1 // pred_region
      _
    $region13: #{tpu_custom_call.1} parent=1 // pred_fallthru
      _
    // Predicated region
    $region14: #{tpu_custom_call.1} parent=1 // pred_check
      _
    $region15: #{tpu_custom_call.1} parent=1 // pred_check_branch
      %27 = sbr.rel (0) target = $region17
    $region16: #{tpu_custom_call.1} parent=1 // pred_region
      %28 = dma.done [#allocation3], 128
    $region17: #{tpu_custom_call.1} parent=1 // pred_fallthru
      _
    %v29 = vld [vmem:[#allocation2] sm:$0xff]
    %v30 = vld [vmem:[%s1] sm:$0xff]
    %v31 = vld [vmem:[%s2] sm:$0xff]
    %vm32 = vcmp.eq.s32.totalorder %v31, 1
    %v33 = vsel %vm32, 1.0, -1.0
    %v34 = vsub.f32 %v30, %v29
    %v35 = vmul.f32 %v33, %v34
    %v36 = vsub.f32 0.0, %v35
    %v37 = vmax.f32 %v36, 0.0
    %v38 = vand.u32 2147483647, %v35
    %v39 = vsub.f32 0.0, %v38
    %v40 = vmul.f32 %v39, 1.442695
    %v41 = vpow.pop %v40
    %v42 = vadd.f32 %v41, 1.0
    %v43 = vlog2.pop %v42
    %v44 = vmul.f32 %v43, 0.6931472
    %v45 = vadd.f32 %v37, %v44
    %v46 = vsub.f32 0.0, %v45
    %v47 = vmul.f32 %v46, 1.442695
    %v48 = vpow.pop %v47
    %v49 = vsub.f32 1.0, %v48
    %v50 = vmul.f32 %v49, %v49
    %v51 = vsub.f32 0.0, %v50
    %v52 = vmul.f32 %v51, %v46
    %s53 = smul.u32 0, 8
    %v54 = vlaneseq
    %v55 = vshrl.u32 %v54, 7
    %v56 = vstv %s53
    %v57 = vadd.s32 %v56, %v55
    %v58 = vlaneseq
    %v59 = vand.u32 %v58, 127
    %v60 = vmul.u32 %v57, 128
    %v61 = vadd.s32 %v60, %v59
    %vm62 = vcmp.lt.s32.totalorder %v61, 37
    %v63 = vsel %vm62, %v52, 0.0
    %64 = vadd.xlane.f32.xlu0 %v63
    %v65 = vpop.xlane.xlu0 %64
    %v66 = vrot.slane %v65, 4
    %v67 = vadd.f32 %v65, %v66
    %v68 = vrot.slane %v67, 2
    %v69 = vadd.f32 %v67, %v68
    %v70 = vrot.slane %v69, 1
    %v71 = vadd.f32 %v69, %v70
    %s72 = vtos %v71
    %v73 = vstv %s72
    %74 = vst [vmem:[#allocation5] sm:$0xff] %v73
    // Predicated region
    $region18: #{tpu_custom_call.1} parent=1 // pred_check
      _
    $region19: #{tpu_custom_call.1} parent=1 // pred_check_branch
      %76 = sbr.rel (0) target = $region21
    $region20: #{tpu_custom_call.1} parent=1 // pred_region
      %s78 = ssub.s32 128, 128
      %79 = vsyncadd [#allocation4], %s78
      %s81 = sshll.u32 [#allocation5], 4
      %s82 = int_to_ptr.vmem [resolvable:$true] %s81
      %84 = dma.vmem_to_hbm [thread:$0]  %s82, 128, %s3, [#allocation4]
    $region21: #{tpu_custom_call.1} parent=1 // pred_fallthru
      _
    // Predicated region
    $region22: #{tpu_custom_call.1} parent=1 // pred_check
      _
    $region23: #{tpu_custom_call.1} parent=1 // pred_check_branch
      %86 = sbr.rel (0) target = $region25
    $region24: #{tpu_custom_call.1} parent=1 // pred_region
      %87 = dma.done [#allocation4], 128
    $region25: #{tpu_custom_call.1} parent=1 // pred_fallthru
      _
    %88 = vsyncpa [#allocation3], 1
    %89 = vsyncpa [#allocation4], 1

</llo_original>
